<compile_context>
chip_gen: v7x
topology: tpu7x:2x2x1
jax: 0.10.0
libtpu: 0.0.40
codegen_flags: <defaults>
</compile_context>

<pallas_src>
import jax
import jax.numpy as jnp
from jax.experimental import pallas as pl
from jax.experimental.pallas import tpu as pltpu


def _emotion_regression_kernel(x_ref, w_ref, b_ref, o_ref):
    # x_ref: (TB, F) VMEM, w_ref: (1, F) VMEM, b_ref: (1,) SMEM, o_ref: (1, TB) VMEM
    x = x_ref[...]                                  # (TB, F) f32
    w = w_ref[...]                                  # (1, F)  f32, lane-dense
    y = jnp.sum(x * w, axis=-1)                     # VPU mul + XLU lane reduce -> (TB,)
    y = jnp.maximum(y + b_ref[0], 0.0)              # bias (SMEM scalar) + ReLU
    o_ref[...] = y[None, :].astype(o_ref.dtype)     # lane-dense (1, TB) store


def emotion_regression_forward(x, w, b, *, tile_budget_bytes=4 << 20):
    """y = relu(x @ w.T + b).

    x: (B, F) f32, w: (1, F) f32 (torch nn.Linear layout), b: (1,) f32 -> (B, 1) f32.
    """
    B, F = x.shape
    assert w.shape == (1, F) and b.shape == (1,)

    # Batch tile: largest multiple of 8 keeping one x block under the budget,
    # capped at 512 rows (mem-bound roofline is already ~85% at 512-row tiles).
    bytes_per_row = F * jnp.dtype(x.dtype).itemsize
    max_rows = max(8, (tile_budget_bytes // bytes_per_row) // 8 * 8)
    max_rows = min(max_rows, 512)

    if B <= max_rows:
        tb, b_pad = B, B                      # single full-batch block (no pad)
    else:
        tb = max_rows
        b_pad = pl.cdiv(B, tb) * tb
    if b_pad != B:
        x = jnp.pad(x, ((0, b_pad - B), (0, 0)))

    # TODO(synk): for very large F (single (8, F) block no longer fitting VMEM),
    # additionally tile the feature axis with an f32 accumulator; not needed at
    # the module's default F=1200.
    out = pl.pallas_call(
        _emotion_regression_kernel,
        out_shape=jax.ShapeDtypeStruct((1, b_pad), jnp.float32),
        grid=(b_pad // tb,),
        in_specs=[
            pl.BlockSpec((tb, F), lambda i: (i, 0)),                 # x batch tile
            pl.BlockSpec((1, F), lambda i: (0, 0)),                  # weight row (lane-dense)
            pl.BlockSpec(memory_space=pltpu.MemorySpace.SMEM),       # bias scalar in SMEM
        ],
        out_specs=pl.BlockSpec((1, tb), lambda i: (0, i)),           # lane-dense output
        compiler_params=pltpu.CompilerParams(
            dimension_semantics=("parallel",)),
    )(x, w, b)

    # Wrapper-side layout plumbing back to torch's (B, 1).
    return out[0, :B].reshape(B, 1)


def _reference(x, w, b):
    y = jax.lax.dot_general(x, w, (((1,), (1,)), ((), ())),
                            precision=jax.lax.Precision.HIGHEST) + b
    return jnp.maximum(y, 0.0)


if __name__ == "__main__":
    features_size = 1200   # module default
    batch = 8

    key = jax.random.PRNGKey(0)
    kx, kw, kb = jax.random.split(key, 3)

    # Mimic torch Linear's U(-1/sqrt(F), 1/sqrt(F)) init; weight in torch layout (1, F).
    bound = 1.0 / jnp.sqrt(jnp.float32(features_size))
    x = jax.random.normal(kx, (batch, features_size), dtype=jnp.float32)
    w = jax.random.uniform(kw, (1, features_size), dtype=jnp.float32,
                           minval=-bound, maxval=bound)
    b = jax.random.uniform(kb, (1,), dtype=jnp.float32,
                           minval=-bound, maxval=bound)

    out = emotion_regression_forward(x, w, b)
    out = jax.block_until_ready(out)
    assert out.shape == (batch, 1)
    assert jnp.allclose(out, _reference(x, w, b), atol=2e-5, rtol=2e-5)

    # Exercise the multi-tile (padded, pipelined) batch path as well.
    B2, F2 = 520, 256
    k2x, k2w, k2b = jax.random.split(jax.random.PRNGKey(1), 3)
    bound2 = 1.0 / jnp.sqrt(jnp.float32(F2))
    x2 = jax.random.normal(k2x, (B2, F2), dtype=jnp.float32)
    w2 = jax.random.uniform(k2w, (1, F2), dtype=jnp.float32,
                            minval=-bound2, maxval=bound2)
    b2 = jax.random.uniform(k2b, (1,), dtype=jnp.float32,
                            minval=-bound2, maxval=bound2)
    out2 = jax.block_until_ready(emotion_regression_forward(x2, w2, b2))
    assert out2.shape == (B2, 1)
    assert jnp.allclose(out2, _reference(x2, w2, b2), atol=2e-5, rtol=2e-5)

    print("KERNEL_OK")
</pallas_src>

<mosaic_0001>
module attributes {stable_mosaic.version = 11 : i64} {
  func.func @_emotion_regression_kernel(%arg0: i32, %arg1: memref<8x1200xf32, #tpu.memory_space<vmem>>, %arg2: memref<1x1200xf32, #tpu.memory_space<vmem>>, %arg3: memref<1xf32, #tpu.memory_space<smem>>, %arg4: memref<1x8xf32, #tpu.memory_space<vmem>>) attributes {dimension_semantics = [#tpu.dimension_semantics<parallel>], iteration_bounds = array<i64: 1>, scalar_prefetch = 0 : i64, scratch_operands = 0 : i64, tpu.core_type = #tpu.core_type<tc>, window_params = [{transform_indices = @transform_0, window_bounds = array<i64: 8, 1200>}, {pipeline_mode = #tpu.pipeline_mode<synchronous>, transform_indices = @transform_1, window_bounds = array<i64: 1, 1200>}, {transform_indices = @transform_2, window_bounds = array<i64: 1>}, {transform_indices = @transform_3, window_bounds = array<i64: 1, 8>}]} {
    %c0 = arith.constant 0 : index
    %c0_0 = arith.constant 0 : index
    %0 = vector.load %arg1[%c0, %c0_0] : memref<8x1200xf32, #tpu.memory_space<vmem>>, vector<8x1200xf32>
    %c0_1 = arith.constant 0 : index
    %c0_2 = arith.constant 0 : index
    %1 = vector.load %arg2[%c0_1, %c0_2] : memref<1x1200xf32, #tpu.memory_space<vmem>>, vector<1x1200xf32>
    %2 = vector.broadcast %1 : vector<1x1200xf32> to vector<8x1200xf32>
    %3 = arith.mulf %0, %2 : vector<8x1200xf32>
    %cst = arith.constant dense<0.000000e+00> : vector<8xf32>
    %4 = vector.multi_reduction <add>, %3, %cst [1] : vector<8x1200xf32> to vector<8xf32>
    %c0_3 = arith.constant 0 : index
    %5 = memref.load %arg3[%c0_3] : memref<1xf32, #tpu.memory_space<smem>>
    %6 = vector.broadcast %5 : f32 to vector<8xf32>
    %7 = arith.addf %4, %6 : vector<8xf32>
    %cst_4 = arith.constant 0.000000e+00 : f32
    %8 = vector.broadcast %cst_4 : f32 to vector<8xf32>
    %9 = arith.maximumf %7, %8 : vector<8xf32>
    %10 = vector.shape_cast %9 : vector<8xf32> to vector<1x8xf32>
    %c0_5 = arith.constant 0 : index
    %c0_6 = arith.constant 0 : index
    %11 = vector.load %arg4[%c0_5, %c0_6] : memref<1x8xf32, #tpu.memory_space<vmem>>, vector<1x8xf32>
    tpu.vector_store %arg4[%c0_5, %c0_6], %10 {strides = array<i32>} : memref<1x8xf32, #tpu.memory_space<vmem>>, vector<1x8xf32>,
    return
  }
  func.func @transform_0(%arg0: i32) -> (i32, i32) {
    %c0_i32 = arith.constant 0 : i32
    %c0_i32_0 = arith.constant 0 : i32
    return %arg0, %c0_i32 : i32, i32
  }
  func.func @transform_1(%arg0: i32) -> (i32, i32) {
    %c0_i32 = arith.constant 0 : i32
    %c0_i32_0 = arith.constant 0 : i32
    %c0_i32_1 = arith.constant 0 : i32
    return %c0_i32, %c0_i32_0 : i32, i32
  }
  func.func @transform_2(%arg0: i32) -> i32 {
    %c0_i32 = arith.constant 0 : i32
    %c0_i32_0 = arith.constant 0 : i32
    return %c0_i32 : i32
  }
  func.func @transform_3(%arg0: i32) -> (i32, i32) {
    %c0_i32 = arith.constant 0 : i32
    %c0_i32_0 = arith.constant 0 : i32
    return %c0_i32, %arg0 : i32, i32
  }
}

</mosaic_0001>

<llo_original>
// kernel: tpu_custom_call.1
$region0: #{tpu_custom_call.1}
  #allocation0 [shape = 'u32[]', space=smem, size = 0x4, offset = 0x4, fixed_abs, tag = 'smem constant byte address 0x4 - core index']
  #allocation1 [shape = 'u32[144,128]{1,0:T(1,128)}', space=vmem, size = 0x12000, scoped, tag = 'internal scratch']
  #allocation2 [shape = 'f32[1]{0:T(128)S(6)}', space=smem, size = 0x200, scoped, tag = 'scoped memory for tpu_custom_call.1']
  %s0 = inlined_call_operand.hbm [shape: f32[8,1200], index: 0, kind: input, shape index: {}]
  %s1 = inlined_call_operand.hbm [shape: f32[1,1200], index: 1, kind: input, shape index: {}]
  %s2 = inlined_call_operand.<no memory space> [shape: f32[1], index: 2, kind: input, shape index: {}]
  %s3 = inlined_call_operand.hbm [shape: f32[1,8], index: 3, kind: output, shape index: {}]
  %s4 = sld [smem:[#allocation0]]
  $region30: #{tpu_custom_call.1} parent=0
    _
  %s6 = ssub.s32 1, %s4
  %s7 = scalar_select 0, %s6, %s4
  %8 = sst [smem:[#allocation2]] %s2
  $region1: #{tpu_custom_call.1} parent=0
    #allocation3 [shape = 'u8[40960]{0}', space=vmem, size = 0xa000, scoped, tag = 'input window, operand 0, single buffered']
    #allocation4 [shape = 's32[1]{0}', space=sflag, size = 0x4, scoped, tag = 'scoped memory for tpu_custom_call.1']
    #allocation5 [shape = 's32[1]{0}', space=sflag, size = 0x4, scoped, tag = 'scoped memory for tpu_custom_call.1']
    #allocation6 [shape = 'u8[5120]{0}', space=vmem, size = 0x1400, scoped, tag = 'input window, operand 1, single buffered']
    #allocation7 [shape = 's32[1]{0}', space=sflag, size = 0x4, scoped, tag = 'scoped memory for tpu_custom_call.1']
    #allocation8 [shape = 'u8[512]{0}', space=vmem, size = 0x400, scoped, tag = 'output window, operand 0, single buffered']
    %9 = vsyncpa [#allocation4], 0
    %10 = vsyncpa [#allocation7], 0
    %11 = vsyncpa [#allocation5], 0
    // Predicated region
    $region2: #{tpu_custom_call.1} parent=1 // pred_check
      _
    $region3: #{tpu_custom_call.1} parent=1 // pred_check_branch
      %13 = sbr.rel (0) target = $region5
    $region4: #{tpu_custom_call.1} parent=1 // pred_region
      %s15 = ssub.s32 1280, 1280
      %16 = vsyncadd [#allocation4], %s15
      %s18 = sshll.u32 [#allocation3], 4
      %s19 = int_to_ptr.vmem [resolvable:$true] %s18
      %21 = dma.hbm_to_vmem [thread:$0]  %s0, 1280, %s19, [#allocation4]
    $region5: #{tpu_custom_call.1} parent=1 // pred_fallthru
      _
    // Predicated region
    $region6: #{tpu_custom_call.1} parent=1 // pred_check
      _
    $region7: #{tpu_custom_call.1} parent=1 // pred_check_branch
      %23 = sbr.rel (0) target = $region9
    $region8: #{tpu_custom_call.1} parent=1 // pred_region
      %s25 = ssub.s32 160, 160
      %26 = vsyncadd [#allocation7], %s25
      %s28 = sshll.u32 [#allocation6], 4
      %s29 = int_to_ptr.vmem [resolvable:$true] %s28
      %31 = dma.hbm_to_vmem [thread:$0]  %s1, 160, %s29, [#allocation7]
    $region9: #{tpu_custom_call.1} parent=1 // pred_fallthru
      _
    // Predicated region
    $region10: #{tpu_custom_call.1} parent=1 // pred_check
      _
    $region11: #{tpu_custom_call.1} parent=1 // pred_check_branch
      %33 = sbr.rel (0) target = $region13
    $region12: #{tpu_custom_call.1} parent=1 // pred_region
      _
    $region13: #{tpu_custom_call.1} parent=1 // pred_fallthru
      _
    // Predicated region
    $region14: #{tpu_custom_call.1} parent=1 // pred_check
      _
    $region15: #{tpu_custom_call.1} parent=1 // pred_check_branch
      %35 = sbr.rel (0) target = $region17
    $region16: #{tpu_custom_call.1} parent=1 // pred_region
      %36 = dma.done [#allocation4], 1280
    $region17: #{tpu_custom_call.1} parent=1 // pred_fallthru
      _
    // Predicated region
    $region18: #{tpu_custom_call.1} parent=1 // pred_check
      _
    $region19: #{tpu_custom_call.1} parent=1 // pred_check_branch
      %38 = sbr.rel (0) target = $region21
    $region20: #{tpu_custom_call.1} parent=1 // pred_region
      %39 = dma.done [#allocation7], 160
    $region21: #{tpu_custom_call.1} parent=1 // pred_fallthru
      _
    %v40 = vld [vmem:[#allocation3] sm:$0xff]
    %v41 = vld [vmem:[#allocation3 + $0x8] sm:$0xff]
    %v42 = vld [vmem:[#allocation3 + $0x10] sm:$0xff]
    %v43 = vld [vmem:[#allocation3 + $0x18] sm:$0xff]
    %v44 = vld [vmem:[#allocation3 + $0x20] sm:$0xff]
    %v45 = vld [vmem:[#allocation3 + $0x28] sm:$0xff]
    %v46 = vld [vmem:[#allocation3 + $0x30] sm:$0xff]
    %v47 = vld [vmem:[#allocation3 + $0x38] sm:$0xff]
    %v48 = vld [vmem:[#allocation3 + $0x40] sm:$0xff]
    %v49 = vld [vmem:[#allocation3 + $0x48] sm:$0xff]
    %v50 = vld [vmem:[#allocation6] sm:$0xff]
    %v51 = vld [vmem:[#allocation6 + $0x8] sm:$0x3]
    %v54 = vlaneseq
    %v55 = vshrl.u32 %v54, 7
    %v56 = vsub.s32 0, %v55
    %v57 = vrot.slane %v50, %v56
    %v58 = vlaneseq
    %v59 = vshrl.u32 %v58, 7
    %v60 = vsub.s32 1, %v59
    %v61 = vrot.slane %v50, %v60
    %v62 = vlaneseq
    %v63 = vshrl.u32 %v62, 7
    %v64 = vsub.s32 2, %v63
    %v65 = vrot.slane %v50, %v64
    %v66 = vlaneseq
    %v67 = vshrl.u32 %v66, 7
    %v68 = vsub.s32 3, %v67
    %v69 = vrot.slane %v50, %v68
    %v70 = vlaneseq
    %v71 = vshrl.u32 %v70, 7
    %v72 = vsub.s32 4, %v71
    %v73 = vrot.slane %v50, %v72
    %v74 = vlaneseq
    %v75 = vshrl.u32 %v74, 7
    %v76 = vsub.s32 5, %v75
    %v77 = vrot.slane %v50, %v76
    %v78 = vlaneseq
    %v79 = vshrl.u32 %v78, 7
    %v80 = vsub.s32 6, %v79
    %v81 = vrot.slane %v50, %v80
    %v82 = vlaneseq
    %v83 = vshrl.u32 %v82, 7
    %v84 = vsub.s32 7, %v83
    %v85 = vrot.slane %v50, %v84
    %v86 = vlaneseq
    %v87 = vshrl.u32 %v86, 7
    %v88 = vsub.s32 0, %v87
    %v89 = vrot.slane %v51, %v88
    %v90 = vlaneseq
    %v91 = vshrl.u32 %v90, 7
    %v92 = vsub.s32 1, %v91
    %v93 = vrot.slane %v51, %v92
    %v104 = vmul.f32 %v40, %v57
    %v105 = vmul.f32 %v41, %v61
    %v106 = vmul.f32 %v42, %v65
    %v107 = vmul.f32 %v43, %v69
    %v108 = vmul.f32 %v44, %v73
    %v109 = vmul.f32 %v45, %v77
    %v110 = vmul.f32 %v46, %v81
    %v111 = vmul.f32 %v47, %v85
    %v112 = vmul.f32 %v48, %v89
    %v113 = vmul.f32 %v49, %v93
    %v114 = vadd.f32 %v104, %v105
    %v115 = vadd.f32 %v114, %v106
    %v116 = vadd.f32 %v115, %v107
    %v117 = vadd.f32 %v116, %v108
    %v118 = vadd.f32 %v117, %v109
    %v119 = vadd.f32 %v118, %v110
    %v120 = vadd.f32 %v119, %v111
    %v121 = vadd.f32 %v120, %v112
    %vm122 = vcmask 392192
    %v123 = vsel %vm122, %v113, 0.0
    %v124 = vadd.f32 %v121, %v123
    %125 = vadd.xlane.f32.xlu0 %v124
    %v126 = vpop.xlane.xlu0 %125
    %s127 = sld [smem:[#allocation2]]
    %v128 = vstv %s127
    %v129 = vadd.f32 %v126, %v128
    %v130 = vmax.f32 %v129, 0.0
    %v132 = vlaneseq
    %v133 = vand.u32 %v132, 127
    %v134 = vlaneseq
    %v135 = vshrl.u32 %v134, 7
    %v136 = vsub.s32 %v133, %v135
    %v137 = vrot.slane %v130, %v136
    %vm139 = vcmask 57344
    %140 = vst.msk [vmem:[#allocation8] sm:$0x1] %vm139, %v137
    // Predicated region
    $region22: #{tpu_custom_call.1} parent=1 // pred_check
      _
    $region23: #{tpu_custom_call.1} parent=1 // pred_check_branch
      %142 = sbr.rel (0) target = $region25
    $region24: #{tpu_custom_call.1} parent=1 // pred_region
      %s144 = ssub.s32 16, 16
      %145 = vsyncadd [#allocation5], %s144
      %s147 = sshll.u32 [#allocation8], 4
      %s148 = int_to_ptr.vmem [resolvable:$true] %s147
      %150 = dma.vmem_to_hbm [thread:$0]  %s148, 16, %s3, [#allocation5]
    $region25: #{tpu_custom_call.1} parent=1 // pred_fallthru
      _
    // Predicated region
    $region26: #{tpu_custom_call.1} parent=1 // pred_check
      _
    $region27: #{tpu_custom_call.1} parent=1 // pred_check_branch
      %152 = sbr.rel (0) target = $region29
    $region28: #{tpu_custom_call.1} parent=1 // pred_region
      %153 = dma.done [#allocation5], 16
    $region29: #{tpu_custom_call.1} parent=1 // pred_fallthru
      _
    %154 = vsyncpa [#allocation4], 1
    %155 = vsyncpa [#allocation7], 1
    %156 = vsyncpa [#allocation5], 1

</llo_original>
